<compile_context>
chip_gen: v5e
topology: v5e:2x2
jax: 0.10.0
libtpu: 0.0.40
codegen_flags: <defaults>
</compile_context>

<pallas_src>
import math
from functools import partial

import jax
import jax.numpy as jnp
from jax.experimental import pallas as pl
from jax.experimental.pallas import tpu as pltpu


def _round_up(a: int, m: int) -> int:
    return ((a + m - 1) // m) * m


def _set_linear_kernel(x_ref, w_ref, b_ref, o_ref, *, groups, k):
    # x_ref: (TM, fin) bf16   w_ref: (fin, F_pad) bf16
    # b_ref: (1, F_pad) f32   o_ref: (TM//K, F_pad) f32
    s = jnp.dot(x_ref[...], w_ref[...],
                preferred_element_type=jnp.float32)          # (TM, F_pad) f32
    s = s.reshape(groups, k, s.shape[-1])                    # (G, K, F_pad)
    o_ref[...] = jnp.max(s, axis=1) + b_ref[...]             # bias after max


def set_linear_layer(x, weight, bias, fout, fmid, *, target_tm=256):
    """
    x:      [B, K, fin]
    weight: [fout, fmid, fin]   (nets[i].weight stacked)
    bias:   [fout, fmid]        (nets[i].bias stacked)
    returns [B, fout, fmid] float32
    """
    B, K, fin = x.shape
    F = fout * fmid
    F_pad = _round_up(max(F, 128), 128)                      # lane-dense output

    # Stack the fout heads into one (fin, F) matrix; zero-pad columns to F_pad.
    w_cat = jnp.transpose(weight.reshape(F, fin)).astype(jnp.float32)
    w_cat = jnp.pad(w_cat, ((0, 0), (0, F_pad - F)))
    b_cat = jnp.pad(bias.reshape(1, F).astype(jnp.float32),
                    ((0, 0), (0, F_pad - F)))

    # Choose the fused-M tile: multiple of K (group integrity) and of 8
    # (sublane); for multi-step grids also TM//K must be a multiple of 8.
    M = B * K
    if M <= target_tm:
        TM = _round_up(M, math.lcm(K, 8))
        M_pad = TM                                           # single grid step
    else:
        unit = 8 * K
        TM = max((target_tm // unit) * unit, unit)
        M_pad = _round_up(M, TM)

    # Zero-pad rows: padding is a whole number of K-groups, discarded below.
    x2 = x.reshape(M, fin).astype(jnp.float32)
    x2 = jnp.pad(x2, ((0, M_pad - M), (0, 0)))

    G = TM // K                                              # output rows / step
    grid = (M_pad // TM,)

    kernel = partial(_set_linear_kernel, groups=G, k=K)

    out = pl.pallas_call(
        kernel,
        out_shape=jax.ShapeDtypeStruct((M_pad // K, F_pad), jnp.float32),
        grid=grid,
        in_specs=[
            pl.BlockSpec((TM, fin), lambda i: (i, 0)),       # x rows tile
            pl.BlockSpec((fin, F_pad), lambda i: (0, 0)),    # resident weights
            pl.BlockSpec((1, F_pad), lambda i: (0, 0)),      # resident bias
        ],
        out_specs=pl.BlockSpec((G, F_pad), lambda i: (i, 0)),
        compiler_params=pltpu.CompilerParams(
            dimension_semantics=("parallel",)),              # megacore split on v7x
    )(x2.astype(jnp.bfloat16), w_cat.astype(jnp.bfloat16), b_cat)

    return out[:B, :F].reshape(B, fout, fmid)


def _reference(x, weight, bias, fout, fmid):
    # pure-JAX reference of the PyTorch forward
    outs = []
    for i in range(fout):
        fm = x @ weight[i].T + bias[i]           # (B, K, fmid)
        outs.append(jnp.max(fm, axis=1))         # (B, fmid)
    return jnp.stack(outs, axis=1)               # (B, fout, fmid)


if __name__ == "__main__":
    # small shapes consistent with the module: set of K=8 feature vectors
    B, K, fin = 2, 8, 32
    fout, fmid = 4, 2

    key = jax.random.PRNGKey(0)
    kx, kw, kb = jax.random.split(key, 3)
    x = jax.random.normal(kx, (B, K, fin), dtype=jnp.float32)
    bound = 1.0 / (fin ** 0.5)
    weight = jax.random.uniform(kw, (fout, fmid, fin), minval=-bound, maxval=bound,
                                dtype=jnp.float32)
    bias = jax.random.uniform(kb, (fout, fmid), minval=-bound, maxval=bound,
                              dtype=jnp.float32)

    out = set_linear_layer(x, weight, bias, fout, fmid)
    out = jax.block_until_ready(out)
    assert out.shape == (B, fout, fmid)

    # Reference matching the kernel's numerics (bf16 matmul inputs, f32 accum).
    ref_bf16 = _reference(x.astype(jnp.bfloat16).astype(jnp.float32),
                          weight.astype(jnp.bfloat16).astype(jnp.float32),
                          bias, fout, fmid)
    assert jnp.allclose(out, ref_bf16, atol=1e-4, rtol=1e-4)

    # Sanity check against the full-f32 reference (loose, bf16 input rounding).
    ref_f32 = _reference(x, weight, bias, fout, fmid)
    assert jnp.allclose(out, ref_f32, atol=5e-2, rtol=5e-2)

    print("KERNEL_OK")
</pallas_src>

<mosaic_0001>
module attributes {stable_mosaic.version = 11 : i64} {
  func.func @_set_linear_kernel(%arg0: i32, %arg1: memref<16x32xbf16, #tpu.memory_space<vmem>>, %arg2: memref<32x128xbf16, #tpu.memory_space<vmem>>, %arg3: memref<1x128xf32, #tpu.memory_space<vmem>>, %arg4: memref<2x128xf32, #tpu.memory_space<vmem>>) attributes {dimension_semantics = [#tpu.dimension_semantics<parallel>], iteration_bounds = array<i64: 1>, scalar_prefetch = 0 : i64, scratch_operands = 0 : i64, tpu.core_type = #tpu.core_type<tc>, window_params = [{transform_indices = @transform_0, window_bounds = array<i64: 16, 32>}, {pipeline_mode = #tpu.pipeline_mode<synchronous>, transform_indices = @transform_1, window_bounds = array<i64: 32, 128>}, {pipeline_mode = #tpu.pipeline_mode<synchronous>, transform_indices = @transform_2, window_bounds = array<i64: 1, 128>}, {transform_indices = @transform_3, window_bounds = array<i64: 2, 128>}]} {
    %c0 = arith.constant 0 : index
    %c0_0 = arith.constant 0 : index
    %0 = vector.load %arg1[%c0, %c0_0] : memref<16x32xbf16, #tpu.memory_space<vmem>>, vector<16x32xbf16>
    %c0_1 = arith.constant 0 : index
    %c0_2 = arith.constant 0 : index
    %1 = vector.load %arg2[%c0_1, %c0_2] : memref<32x128xbf16, #tpu.memory_space<vmem>>, vector<32x128xbf16>
    %cst = arith.constant dense<0.000000e+00> : vector<16x128xf32>
    %2 = tpu.matmul %0, %1, %cst {dimension_numbers = #tpu.dot_dimension_numbers<[1], [0], [0], [1], [0, 0, 1, 1], [], []>} : vector<16x32xbf16>, vector<32x128xbf16>, vector<16x128xf32> -> vector<16x128xf32>
    %3 = vector.shape_cast %2 : vector<16x128xf32> to vector<2x8x128xf32>
    %cst_3 = arith.constant dense<0xFF800000> : vector<2x128xf32>
    %4 = vector.multi_reduction <maximumf>, %3, %cst_3 [1] : vector<2x8x128xf32> to vector<2x128xf32>
    %c0_4 = arith.constant 0 : index
    %c0_5 = arith.constant 0 : index
    %5 = vector.load %arg3[%c0_4, %c0_5] : memref<1x128xf32, #tpu.memory_space<vmem>>, vector<1x128xf32>
    %6 = vector.broadcast %5 : vector<1x128xf32> to vector<2x128xf32>
    %7 = arith.addf %4, %6 : vector<2x128xf32>
    %c0_6 = arith.constant 0 : index
    %c0_7 = arith.constant 0 : index
    %8 = vector.load %arg4[%c0_6, %c0_7] : memref<2x128xf32, #tpu.memory_space<vmem>>, vector<2x128xf32>
    tpu.vector_store %arg4[%c0_6, %c0_7], %7 {strides = array<i32>} : memref<2x128xf32, #tpu.memory_space<vmem>>, vector<2x128xf32>,
    return
  }
  func.func @transform_0(%arg0: i32) -> (i32, i32) {
    %c0_i32 = arith.constant 0 : i32
    %c0_i32_0 = arith.constant 0 : i32
    return %arg0, %c0_i32 : i32, i32
  }
  func.func @transform_1(%arg0: i32) -> (i32, i32) {
    %c0_i32 = arith.constant 0 : i32
    %c0_i32_0 = arith.constant 0 : i32
    %c0_i32_1 = arith.constant 0 : i32
    return %c0_i32, %c0_i32_0 : i32, i32
  }
  func.func @transform_2(%arg0: i32) -> (i32, i32) {
    %c0_i32 = arith.constant 0 : i32
    %c0_i32_0 = arith.constant 0 : i32
    %c0_i32_1 = arith.constant 0 : i32
    return %c0_i32, %c0_i32_0 : i32, i32
  }
  func.func @transform_3(%arg0: i32) -> (i32, i32) {
    %c0_i32 = arith.constant 0 : i32
    %c0_i32_0 = arith.constant 0 : i32
    return %arg0, %c0_i32 : i32, i32
  }
}

</mosaic_0001>

<llo_original>
// kernel: tpu_custom_call.1
$region0: #{tpu_custom_call.1}
  #allocation0 [shape = 'u32[]', space=smem, size = 0x4, offset = 0x4, fixed_abs, tag = 'smem constant byte address 0x4 - core index']
  #allocation1 [shape = 'u32[72,128]{1,0:T(1,128)}', space=vmem, size = 0x9000, scoped, tag = 'internal scratch']
  %s0 = inlined_call_operand.hbm [shape: bf16[16,32], index: 0, kind: input, shape index: {}]
  %s1 = inlined_call_operand.hbm [shape: bf16[32,128], index: 1, kind: input, shape index: {}]
  %s2 = inlined_call_operand.vmem [shape: f32[1,128], index: 2, kind: input, shape index: {}]
  %s3 = inlined_call_operand.hbm [shape: f32[2,128], index: 3, kind: output, shape index: {}]
  %s4 = sld [smem:[#allocation0]]
  $region30: #{tpu_custom_call.1} parent=0
    _
  %s6 = ssub.s32 1, %s4
  %s7 = scalar_select 0, %s6, %s4
  $region1: #{tpu_custom_call.1} parent=0
    #allocation2 [shape = 'u8[4096]{0}', space=vmem, size = 0x1000, scoped, tag = 'input window, operand 0, single buffered']
    #allocation3 [shape = 's32[1]{0}', space=sflag, size = 0x4, scoped, tag = 'scoped memory for tpu_custom_call.1']
    #allocation4 [shape = 's32[1]{0}', space=sflag, size = 0x4, scoped, tag = 'scoped memory for tpu_custom_call.1']
    #allocation5 [shape = 'u8[8192]{0}', space=vmem, size = 0x2000, scoped, tag = 'input window, operand 1, single buffered']
    #allocation6 [shape = 's32[1]{0}', space=sflag, size = 0x4, scoped, tag = 'scoped memory for tpu_custom_call.1']
    #allocation7 [shape = 'u8[1024]{0}', space=vmem, size = 0x400, scoped, tag = 'output window, operand 0, single buffered']
    %8 = vsyncpa [#allocation3], 0
    %9 = vsyncpa [#allocation6], 0
    %10 = vsyncpa [#allocation4], 0
    // Predicated region
    $region2: #{tpu_custom_call.1} parent=1 // pred_check
      _
    $region3: #{tpu_custom_call.1} parent=1 // pred_check_branch
      %12 = sbr.rel (0) target = $region5
    $region4: #{tpu_custom_call.1} parent=1 // pred_region
      %14 = vsyncadd [#allocation3], 0
      %s15 = sshll.u32 %s0, 4
      %s16 = int_to_ptr.hbm [resolvable:$true] %s15
      %s17 = sshll.u32 [#allocation2], 4
      %s18 = int_to_ptr.vmem [resolvable:$true] %s17
      %23 = dma.hbm_to_vmem [thread:$0]  %s16, 128, %s18, [#allocation3], 64, 64, 4
    $region5: #{tpu_custom_call.1} parent=1 // pred_fallthru
      _
    // Predicated region
    $region6: #{tpu_custom_call.1} parent=1 // pred_check
      _
    $region7: #{tpu_custom_call.1} parent=1 // pred_check_branch
      %25 = sbr.rel (0) target = $region9
    $region8: #{tpu_custom_call.1} parent=1 // pred_region
      %27 = vsyncadd [#allocation6], 0
      %s28 = sshll.u32 %s1, 4
      %s29 = int_to_ptr.hbm [resolvable:$true] %s28
      %s30 = sshll.u32 [#allocation5], 4
      %s31 = int_to_ptr.vmem [resolvable:$true] %s30
      %36 = dma.hbm_to_vmem [thread:$0]  %s29, 256, %s31, [#allocation6], 64, 64, 4
    $region9: #{tpu_custom_call.1} parent=1 // pred_fallthru
      _
    // Predicated region
    $region10: #{tpu_custom_call.1} parent=1 // pred_check
      _
    $region11: #{tpu_custom_call.1} parent=1 // pred_check_branch
      %38 = sbr.rel (0) target = $region13
    $region12: #{tpu_custom_call.1} parent=1 // pred_region
      _
    $region13: #{tpu_custom_call.1} parent=1 // pred_fallthru
      _
    // Predicated region
    $region14: #{tpu_custom_call.1} parent=1 // pred_check
      _
    $region15: #{tpu_custom_call.1} parent=1 // pred_check_branch
      %40 = sbr.rel (0) target = $region17
    $region16: #{tpu_custom_call.1} parent=1 // pred_region
      %42 = dma.done [#allocation3], 128
    $region17: #{tpu_custom_call.1} parent=1 // pred_fallthru
      _
    // Predicated region
    $region18: #{tpu_custom_call.1} parent=1 // pred_check
      _
    $region19: #{tpu_custom_call.1} parent=1 // pred_check_branch
      %44 = sbr.rel (0) target = $region21
    $region20: #{tpu_custom_call.1} parent=1 // pred_region
      %46 = dma.done [#allocation6], 256
    $region21: #{tpu_custom_call.1} parent=1 // pred_fallthru
      _
    %v48 = vld [vmem:[#allocation2] sm:$0xf]
    %v49 = vld [vmem:[#allocation2 + $0x4] sm:$0xf]
    %v50 = vld [vmem:[#allocation5] sm:$0xf]
    %v51 = vld [vmem:[#allocation5 + $0x4] sm:$0xf]
    %v52 = vld [vmem:[#allocation5 + $0x8] sm:$0xf]
    %v53 = vld [vmem:[#allocation5 + $0xc] sm:$0xf]
    %v56 = vunpack.c.l.b16 %v48
    %v57 = vunpack.c.l.b16 %v49
    %v58 = vpack.c.b16 %v57, %v56
    %v63 = vunpack.c.l.b16 %v50
    %v64 = vunpack.c.l.b16 %v51
    %v65 = vunpack.c.l.b16 %v52
    %v66 = vunpack.c.l.b16 %v53
    %v67 = vpack.c.b16 %v64, %v63
    %v68 = vpack.c.b16 %v66, %v65
    %vm71 = vcmask 261120
    %v73 = vsel %vm71, %v58, 0
    %75 = vmatpush.bf16.msra.mxu0 0
    %76 = vmatpush.bf16.msra.mxu0 0
    %77 = vmatpush.bf16.msra.mxu0 0
    %78 = vmatpush.bf16.msra.mxu0 0
    %79 = vmatpush.bf16.msra.mxu0 0
    %80 = vmatpush.bf16.msra.mxu0 0
    %81 = vmatpush.bf16.msra.mxu0 %v68
    %82 = vmatpush.bf16.msra.mxu0 %v67
    %83 = vmatmul.bf16.gmra.mxu0 %v73
    %v84 = vpop.f32.mrf.mxu0
    %v85 = vadd.f32 0.0, %v84
    %v86 = vpop.f32.mrf.mxu0
    %v87 = vadd.f32 0.0, %v86
    %88 = vdwg.mxu0
    %v89 = vrot.slane %v85, 4
    %v90 = vmax.f32 %v85, %v89
    %v91 = vrot.slane %v90, 2
    %v92 = vmax.f32 %v90, %v91
    %v93 = vrot.slane %v92, 1
    %v94 = vmax.f32 %v92, %v93
    %v95 = vrot.slane %v87, 4
    %v96 = vmax.f32 %v87, %v95
    %v97 = vrot.slane %v96, 2
    %v98 = vmax.f32 %v96, %v97
    %v99 = vrot.slane %v98, 1
    %v100 = vmax.f32 %v98, %v99
    %v101 = vld [vmem:[%s2] sm:$0x1]
    %v103 = vperm.slane %v101, 0
    %v105 = vadd.f32 %v94, %v103
    %v106 = vadd.f32 %v100, %v103
    %v109 = vrot.slane %v106, 7
    %vm110 = vcmask 1041409
    %v111 = vsel %vm110, %v109, %v105
    %113 = vst [vmem:[#allocation7] sm:$0x3] %v111
    // Predicated region
    $region22: #{tpu_custom_call.1} parent=1 // pred_check
      _
    $region23: #{tpu_custom_call.1} parent=1 // pred_check_branch
      %115 = sbr.rel (0) target = $region25
    $region24: #{tpu_custom_call.1} parent=1 // pred_region
      %117 = vsyncadd [#allocation4], 0
      %s119 = sshll.u32 [#allocation7], 4
      %s120 = int_to_ptr.vmem [resolvable:$true] %s119
      %s121 = sshll.u32 %s3, 4
      %s122 = int_to_ptr.hbm [resolvable:$true] %s121
      %124 = dma.vmem_to_hbm [thread:$0]  %s120, 32, %s122, [#allocation4]
    $region25: #{tpu_custom_call.1} parent=1 // pred_fallthru
      _
    // Predicated region
    $region26: #{tpu_custom_call.1} parent=1 // pred_check
      _
    $region27: #{tpu_custom_call.1} parent=1 // pred_check_branch
      %126 = sbr.rel (0) target = $region29
    $region28: #{tpu_custom_call.1} parent=1 // pred_region
      %128 = dma.done [#allocation4], 32
    $region29: #{tpu_custom_call.1} parent=1 // pred_fallthru
      _
    %129 = vsyncpa [#allocation3], 1
    %130 = vsyncpa [#allocation6], 1
    %131 = vsyncpa [#allocation4], 1

</llo_original>
